<compile_context>
chip_gen: v7x
topology: tpu7x:2x2x1
jax: 0.10.0
libtpu: 0.0.40
codegen_flags: <defaults>
</compile_context>

<pallas_src>
import jax
import jax.numpy as jnp
from jax.experimental import pallas as pl
from jax.experimental.pallas import tpu as pltpu

LANE = 128


def _round_up(x, m):
    return (x + m - 1) // m * m


def _make_mlp_kernel(num_layers, compute_dtype):
    """Build a fused MLP kernel body for `num_layers` Linear layers."""

    def kernel(*refs):
        x_ref = refs[0]
        o_ref = refs[-1]
        wb = refs[1:-1]                       # (w1, b1, w2, b2, ...)
        h = x_ref[...]                        # row tile in compute dtype (MXU input)
        for li in range(num_layers):
            w_ref, b_ref = wb[2 * li], wb[2 * li + 1]
            # MXU matmul with f32 accumulation; bias/ReLU epilogue kept in f32 (VPU).
            acc = jnp.dot(h, w_ref[...], preferred_element_type=jnp.float32)
            acc = acc + b_ref[...]
            if li < num_layers - 1:
                acc = jnp.maximum(acc, 0.0)
                # TODO(synk): training-mode dropout (pltpu.prng_random_bits mask) not wired in.
                h = acc.astype(compute_dtype)  # feed next MXU matmul in compute dtype
            else:
                h = acc
        o_ref[...] = h.astype(o_ref.dtype)

    return kernel


def node_classifier_forward(x, params, *, tm=1024, min_grid_steps=2,
                            compute_dtype=jnp.float32):
    """Fused NodeClassifier forward (eval mode).

    params: tuple of (w, b) per layer, w: [C_in, C_out], b: [C_out].
    compute_dtype: dtype fed to the MXU (f32 for exact semantics, bf16 for speed
    on v6e/v7x); accumulation and the bias/ReLU epilogue are always f32.
    """
    num_layers = len(params)
    n, c_in = x.shape
    c_out = params[-1][0].shape[1]
    out_dtype = x.dtype

    # ---- row tile: big (amortize ~0.35us/step) but >= min_grid_steps grid steps
    # so v7x's two TensorCores both get work; multiple of 16 covers f32+bf16 tiling.
    tm_eff = max(16, min(tm, _round_up(pl.cdiv(n, min_grid_steps), 16)))
    n_pad = _round_up(n, tm_eff)

    # ---- lane-dense features: zero-pad the input dim and every layer's output
    # dim (and matching next-layer input dim) to a multiple of 128 so every
    # load/store is an unmasked full-lane op.  Zero padding keeps results exact.
    c_in_pad = _round_up(c_in, LANE)
    padded = []
    prev = c_in_pad
    for (w, b) in params:
        ci, co = w.shape
        co_p = _round_up(co, LANE)
        w_p = jnp.zeros((prev, co_p), compute_dtype).at[:ci, :co].set(
            w.astype(compute_dtype))
        b_p = jnp.zeros((1, co_p), jnp.float32).at[0, :co].set(
            b.astype(jnp.float32))
        padded.append((w_p, b_p))
        prev = co_p
    c_out_pad = prev

    # ---- pad rows/cols of x and cast to the MXU input dtype.
    x_p = jnp.zeros((n_pad, c_in_pad), compute_dtype).at[:n, :c_in].set(
        x.astype(compute_dtype))

    grid = (n_pad // tm_eff,)

    in_specs = [pl.BlockSpec((tm_eff, c_in_pad), lambda i: (i, 0))]
    flat_args = [x_p]
    for (w_p, b_p) in padded:
        in_specs.append(pl.BlockSpec(w_p.shape, lambda i: (0, 0)))   # resident weight
        in_specs.append(pl.BlockSpec(b_p.shape, lambda i: (0, 0)))   # resident bias
        flat_args += [w_p, b_p]
    out_specs = pl.BlockSpec((tm_eff, c_out_pad), lambda i: (i, 0))

    # ---- advisory cost estimate + explicit VMEM budget (double-buffered tiles).
    itemsize_c = jnp.dtype(compute_dtype).itemsize
    itemsize_o = jnp.dtype(out_dtype).itemsize
    flops = 2 * n_pad * sum(w.shape[0] * w.shape[1] for w, _ in padded)
    bytes_accessed = (x_p.size * itemsize_c
                      + n_pad * c_out_pad * itemsize_o
                      + sum(int(w.size) * itemsize_c + int(b.size) * 4
                            for w, b in padded))
    max_dim = max([c_in_pad] + [w.shape[1] for w, _ in padded])
    vmem_est = (2 * tm_eff * c_in_pad * itemsize_c        # x tile, double-buffered
                + 2 * tm_eff * c_out_pad * itemsize_o     # out tile, double-buffered
                + sum(int(w.size) * itemsize_c + int(b.size) * 4 for w, b in padded)
                + 3 * tm_eff * max_dim * 4)               # live f32 intermediates
    vmem_limit = int(min(max(2 * vmem_est, 16 << 20), 48 << 20))

    out_pad = pl.pallas_call(
        _make_mlp_kernel(num_layers, compute_dtype),
        out_shape=jax.ShapeDtypeStruct((n_pad, c_out_pad), out_dtype),
        grid_spec=pltpu.PrefetchScalarGridSpec(
            num_scalar_prefetch=0,
            grid=grid,
            in_specs=in_specs,
            out_specs=out_specs,
        ),
        compiler_params=pltpu.CompilerParams(
            dimension_semantics=("parallel",),
            vmem_limit_bytes=vmem_limit,
        ),
        cost_estimate=pl.CostEstimate(
            flops=flops, transcendentals=0, bytes_accessed=bytes_accessed),
    )(*flat_args)

    return out_pad[:n, :c_out]


def init_params(key, in_channels, hidden_channels, out_channels, num_layers):
    """Deterministic init mimicking torch.nn.Linear (uniform +-1/sqrt(fan_in))."""
    dims = [in_channels] + [hidden_channels] * (num_layers - 1) + [out_channels]
    params = []
    for li in range(num_layers):
        fan_in, fan_out = dims[li], dims[li + 1]
        key, kw, kb = jax.random.split(key, 3)
        bound = 1.0 / jnp.sqrt(jnp.float32(fan_in))
        w = jax.random.uniform(kw, (fan_in, fan_out), jnp.float32, -bound, bound)
        b = jax.random.uniform(kb, (fan_out,), jnp.float32, -bound, bound)
        params.append((w, b))
    return tuple(params)


def _reference_forward(x, params, compute_dtype=jnp.float32):
    """Pure-JAX reference matching the kernel's dtype strategy."""
    h = x.astype(compute_dtype)
    num_layers = len(params)
    for li, (w, b) in enumerate(params):
        acc = jnp.dot(h, w.astype(compute_dtype),
                      preferred_element_type=jnp.float32) + b.astype(jnp.float32)
        if li < num_layers - 1:
            acc = jnp.maximum(acc, 0.0)
            h = acc.astype(compute_dtype)
        else:
            h = acc
    return h.astype(x.dtype)


if __name__ == "__main__":
    # Small shapes consistent with the module (3-layer MLP); N not a multiple
    # of the tile to exercise the row/feature padding paths.
    N, IN_C, HID_C, OUT_C, NUM_LAYERS = 300, 32, 64, 16, 3

    key = jax.random.PRNGKey(0)
    kx, kp = jax.random.split(key)
    x = jax.random.normal(kx, (N, IN_C), jnp.float32)
    params = init_params(kp, IN_C, HID_C, OUT_C, NUM_LAYERS)

    # f32 path: exact module semantics.
    out = jax.block_until_ready(node_classifier_forward(x, params))
    ref = _reference_forward(x, params)
    assert out.shape == (N, OUT_C)
    assert jnp.allclose(out, ref, atol=1e-4, rtol=1e-4)

    # bf16 MXU-input path (perf mode for v6e/v7x), f32 accumulation.
    out_bf16 = jax.block_until_ready(
        node_classifier_forward(x, params, compute_dtype=jnp.bfloat16))
    ref_bf16 = _reference_forward(x, params, compute_dtype=jnp.bfloat16)
    assert out_bf16.shape == (N, OUT_C)
    assert jnp.allclose(out_bf16, ref_bf16, atol=2e-2, rtol=2e-2)

    print("KERNEL_OK")
</pallas_src>

<mosaic_0001>
module attributes {stable_mosaic.version = 11 : i64} {
  func.func @kernel(%arg0: i32, %arg1: memref<160x128xf32, #tpu.memory_space<vmem>>, %arg2: memref<128x128xf32, #tpu.memory_space<vmem>>, %arg3: memref<1x128xf32, #tpu.memory_space<vmem>>, %arg4: memref<128x128xf32, #tpu.memory_space<vmem>>, %arg5: memref<1x128xf32, #tpu.memory_space<vmem>>, %arg6: memref<128x128xf32, #tpu.memory_space<vmem>>, %arg7: memref<1x128xf32, #tpu.memory_space<vmem>>, %arg8: memref<160x128xf32, #tpu.memory_space<vmem>>) attributes {dimension_semantics = [#tpu.dimension_semantics<parallel>], iteration_bounds = array<i64: 2>, scalar_prefetch = 0 : i64, scratch_operands = 0 : i64, tpu.core_type = #tpu.core_type<tc>, window_params = [{transform_indices = @transform_0, window_bounds = array<i64: 160, 128>}, {pipeline_mode = #tpu.pipeline_mode<synchronous>, transform_indices = @transform_1, window_bounds = array<i64: 128, 128>}, {pipeline_mode = #tpu.pipeline_mode<synchronous>, transform_indices = @transform_2, window_bounds = array<i64: 1, 128>}, {pipeline_mode = #tpu.pipeline_mode<synchronous>, transform_indices = @transform_3, window_bounds = array<i64: 128, 128>}, {pipeline_mode = #tpu.pipeline_mode<synchronous>, transform_indices = @transform_4, window_bounds = array<i64: 1, 128>}, {pipeline_mode = #tpu.pipeline_mode<synchronous>, transform_indices = @transform_5, window_bounds = array<i64: 128, 128>}, {pipeline_mode = #tpu.pipeline_mode<synchronous>, transform_indices = @transform_6, window_bounds = array<i64: 1, 128>}, {transform_indices = @transform_7, window_bounds = array<i64: 160, 128>}]} {
    %c0 = arith.constant 0 : index
    %c0_0 = arith.constant 0 : index
    %0 = vector.load %arg1[%c0, %c0_0] : memref<160x128xf32, #tpu.memory_space<vmem>>, vector<160x128xf32>
    %c0_1 = arith.constant 0 : index
    %c0_2 = arith.constant 0 : index
    %1 = vector.load %arg2[%c0_1, %c0_2] : memref<128x128xf32, #tpu.memory_space<vmem>>, vector<128x128xf32>
    %cst = arith.constant dense<0.000000e+00> : vector<160x128xf32>
    %2 = tpu.matmul %0, %1, %cst {dimension_numbers = #tpu.dot_dimension_numbers<[1], [0], [0], [1], [0, 0, 1, 1], [], []>} : vector<160x128xf32>, vector<128x128xf32>, vector<160x128xf32> -> vector<160x128xf32>
    %c0_3 = arith.constant 0 : index
    %c0_4 = arith.constant 0 : index
    %3 = vector.load %arg3[%c0_3, %c0_4] : memref<1x128xf32, #tpu.memory_space<vmem>>, vector<1x128xf32>
    %4 = vector.broadcast %3 : vector<1x128xf32> to vector<160x128xf32>
    %5 = arith.addf %2, %4 : vector<160x128xf32>
    %cst_5 = arith.constant 0.000000e+00 : f32
    %6 = vector.broadcast %cst_5 : f32 to vector<160x128xf32>
    %7 = arith.maximumf %5, %6 : vector<160x128xf32>
    %c0_6 = arith.constant 0 : index
    %c0_7 = arith.constant 0 : index
    %8 = vector.load %arg4[%c0_6, %c0_7] : memref<128x128xf32, #tpu.memory_space<vmem>>, vector<128x128xf32>
    %cst_8 = arith.constant dense<0.000000e+00> : vector<160x128xf32>
    %9 = tpu.matmul %7, %8, %cst_8 {dimension_numbers = #tpu.dot_dimension_numbers<[1], [0], [0], [1], [0, 0, 1, 1], [], []>} : vector<160x128xf32>, vector<128x128xf32>, vector<160x128xf32> -> vector<160x128xf32>
    %c0_9 = arith.constant 0 : index
    %c0_10 = arith.constant 0 : index
    %10 = vector.load %arg5[%c0_9, %c0_10] : memref<1x128xf32, #tpu.memory_space<vmem>>, vector<1x128xf32>
    %11 = vector.broadcast %10 : vector<1x128xf32> to vector<160x128xf32>
    %12 = arith.addf %9, %11 : vector<160x128xf32>
    %cst_11 = arith.constant 0.000000e+00 : f32
    %13 = vector.broadcast %cst_11 : f32 to vector<160x128xf32>
    %14 = arith.maximumf %12, %13 : vector<160x128xf32>
    %c0_12 = arith.constant 0 : index
    %c0_13 = arith.constant 0 : index
    %15 = vector.load %arg6[%c0_12, %c0_13] : memref<128x128xf32, #tpu.memory_space<vmem>>, vector<128x128xf32>
    %cst_14 = arith.constant dense<0.000000e+00> : vector<160x128xf32>
    %16 = tpu.matmul %14, %15, %cst_14 {dimension_numbers = #tpu.dot_dimension_numbers<[1], [0], [0], [1], [0, 0, 1, 1], [], []>} : vector<160x128xf32>, vector<128x128xf32>, vector<160x128xf32> -> vector<160x128xf32>
    %c0_15 = arith.constant 0 : index
    %c0_16 = arith.constant 0 : index
    %17 = vector.load %arg7[%c0_15, %c0_16] : memref<1x128xf32, #tpu.memory_space<vmem>>, vector<1x128xf32>
    %18 = vector.broadcast %17 : vector<1x128xf32> to vector<160x128xf32>
    %19 = arith.addf %16, %18 : vector<160x128xf32>
    %c0_17 = arith.constant 0 : index
    %c0_18 = arith.constant 0 : index
    %20 = vector.load %arg8[%c0_17, %c0_18] : memref<160x128xf32, #tpu.memory_space<vmem>>, vector<160x128xf32>
    tpu.vector_store %arg8[%c0_17, %c0_18], %19 {strides = array<i32>} : memref<160x128xf32, #tpu.memory_space<vmem>>, vector<160x128xf32>,
    return
  }
  func.func @transform_0(%arg0: i32) -> (i32, i32) {
    %c0_i32 = arith.constant 0 : i32
    %c0_i32_0 = arith.constant 0 : i32
    return %arg0, %c0_i32 : i32, i32
  }
  func.func @transform_1(%arg0: i32) -> (i32, i32) {
    %c0_i32 = arith.constant 0 : i32
    %c0_i32_0 = arith.constant 0 : i32
    %c0_i32_1 = arith.constant 0 : i32
    return %c0_i32, %c0_i32_0 : i32, i32
  }
  func.func @transform_2(%arg0: i32) -> (i32, i32) {
    %c0_i32 = arith.constant 0 : i32
    %c0_i32_0 = arith.constant 0 : i32
    %c0_i32_1 = arith.constant 0 : i32
    return %c0_i32, %c0_i32_0 : i32, i32
  }
  func.func @transform_3(%arg0: i32) -> (i32, i32) {
    %c0_i32 = arith.constant 0 : i32
    %c0_i32_0 = arith.constant 0 : i32
    %c0_i32_1 = arith.constant 0 : i32
    return %c0_i32, %c0_i32_0 : i32, i32
  }
  func.func @transform_4(%arg0: i32) -> (i32, i32) {
    %c0_i32 = arith.constant 0 : i32
    %c0_i32_0 = arith.constant 0 : i32
    %c0_i32_1 = arith.constant 0 : i32
    return %c0_i32, %c0_i32_0 : i32, i32
  }
  func.func @transform_5(%arg0: i32) -> (i32, i32) {
    %c0_i32 = arith.constant 0 : i32
    %c0_i32_0 = arith.constant 0 : i32
    %c0_i32_1 = arith.constant 0 : i32
    return %c0_i32, %c0_i32_0 : i32, i32
  }
  func.func @transform_6(%arg0: i32) -> (i32, i32) {
    %c0_i32 = arith.constant 0 : i32
    %c0_i32_0 = arith.constant 0 : i32
    %c0_i32_1 = arith.constant 0 : i32
    return %c0_i32, %c0_i32_0 : i32, i32
  }
  func.func @transform_7(%arg0: i32) -> (i32, i32) {
    %c0_i32 = arith.constant 0 : i32
    %c0_i32_0 = arith.constant 0 : i32
    return %arg0, %c0_i32 : i32, i32
  }
}

</mosaic_0001>

<llo_original>
// kernel: tpu_custom_call.1
$region0: #{tpu_custom_call.1}
  #allocation0 [shape = 'u32[]', space=smem, size = 0x4, offset = 0x4, fixed_abs, tag = 'smem constant byte address 0x4 - core index']
  #allocation1 [shape = 'u32[144,128]{1,0:T(1,128)}', space=vmem, size = 0x12000, scoped, tag = 'internal scratch']
  %s0 = inlined_call_operand.hbm [shape: f32[320,128], index: 0, kind: input, shape index: {}]
  %s1 = inlined_call_operand.hbm [shape: f32[128,128], index: 1, kind: input, shape index: {}]
  %s2 = inlined_call_operand.vmem [shape: f32[1,128], index: 2, kind: input, shape index: {}]
  %s3 = inlined_call_operand.hbm [shape: f32[128,128], index: 3, kind: input, shape index: {}]
  %s4 = inlined_call_operand.vmem [shape: f32[1,128], index: 4, kind: input, shape index: {}]
  %s5 = inlined_call_operand.hbm [shape: f32[128,128], index: 5, kind: input, shape index: {}]
  %s6 = inlined_call_operand.vmem [shape: f32[1,128], index: 6, kind: input, shape index: {}]
  %s7 = inlined_call_operand.hbm [shape: f32[320,128], index: 7, kind: output, shape index: {}]
  %s8 = sld [smem:[#allocation0]]
  $region77: #{tpu_custom_call.1} parent=0
    _
  %s10 = ssub.s32 1, %s8
  %s11 = scalar_select 0, %s10, %s8
  $region1: #{tpu_custom_call.1} parent=0
    #allocation2 [shape = 'u8[163840]{0}', space=vmem, size = 0x28000, scoped, tag = 'input window, operand 0']
    #allocation3 [shape = 's32[2]{0}', space=sflag, size = 0x8, scoped, tag = 'scoped memory for tpu_custom_call.1']
    #allocation4 [shape = 's32[2]{0}', space=sflag, size = 0x8, scoped, tag = 'scoped memory for tpu_custom_call.1']
    #allocation5 [shape = 'u8[65536]{0}', space=vmem, size = 0x10000, scoped, tag = 'input window, operand 1, single buffered']
    #allocation6 [shape = 's32[1]{0}', space=sflag, size = 0x4, scoped, tag = 'scoped memory for tpu_custom_call.1']
    #allocation7 [shape = 'u8[65536]{0}', space=vmem, size = 0x10000, scoped, tag = 'input window, operand 3, single buffered']
    #allocation8 [shape = 'u8[65536]{0}', space=vmem, size = 0x10000, scoped, tag = 'input window, operand 5, single buffered']
    #allocation9 [shape = 's32[1]{0}', space=sflag, size = 0x4, scoped, tag = 'scoped memory for tpu_custom_call.1']
    #allocation10 [shape = 'u8[163840]{0}', space=vmem, size = 0x28000, scoped, tag = 'output window, operand 0']
    %12 = vsyncpa [#allocation3], 0
    %s13 = scalar_lea.sflag [#allocation3], 1
    %14 = vsyncpa %s13, 0
    %15 = vsyncpa [#allocation6], 0
    %16 = vsyncpa [#allocation9], 0
    %17 = vsyncpa [#allocation4], 0
    %s18 = scalar_lea.sflag [#allocation4], 1
    %19 = vsyncpa %s18, 0
    loop: start=0, step=1, limit=4
    $region2: #{tpu_custom_call.1} parent=1 // loop_pre_header
      _
    $region3: #{tpu_custom_call.1} parent=1 // loop_header
      %s21 = sphi 0, %s25
      %p22 = scmp.ge.s32.totalorder %s21, 4
      %s31 = sphi 0, %s33
      %s34 = sphi 0, %s31
      %s35 = sphi 0, %s34
      %s51 = sphi 0, %s35
      %s55 = sphi 0, %s55
      %s57 = sphi 0, %s55
      %s58 = sphi 0, %s57
      %s72 = sphi 0, %s58
      %s76 = sphi 0, %s76
      %s78 = sphi 0, %s76
      %s79 = sphi 0, %s78
      %s93 = sphi 0, %s79
      %s97 = sphi 0, %s97
      %s99 = sphi 0, %s97
      %s100 = sphi 0, %s99
      %s114 = sphi 0, %s100
      %s118 = sphi 0, %s118
      %s120 = sphi 0, %s118
      %s121 = sphi 0, %s120
      %s135 = sphi 0, %s121
      %s139 = sphi 0, %s139
      %s141 = sphi 0, %s139
      %s142 = sphi 0, %s141
      %s156 = sphi 0, %s142
      %s160 = sphi 0, %s160
      %s162 = sphi 0, %s160
      %s163 = sphi 0, %s162
      %s177 = sphi 0, %s163
      %s183 = sphi 0, %s185
      %s186 = sphi 0, %s183
      %s187 = sphi 0, %s186
      %s203 = sphi 0, %s187
    $region4: #{tpu_custom_call.1} parent=1 // loop_header_branch
      %24 = sbr.rel (%p22) target = $region8
    $region5: #{tpu_custom_call.1} parent=1 // loop_body
      %s26 = ssub.s32 %s21, 1
      %s27 = ssub.s32 %s21, 2
      %s28 = sadd.s32 %s21, 1
      %s29 = ssub.s32 %s21, %s28
      %p30 = scmp.eq.s32.totalorder %s29, 0
      %s32 = sadd.s32 %s31, 1
      %s33 = scalar_select %p30, %s31, %s32
      %p36 = pneg %p30
      %p37 = scmp.eq.s32.totalorder %s21, 1
      %p38 = por %p36, %p37
      %p39 = scmp.ne.s32.totalorder %s31, %s34
      %p40 = scmp.eq.s32.totalorder %s21, 0
      %p41 = por %p39, %p40
      %p42 = scmp.ne.s32.totalorder %s31, %s34
      %p43 = scmp.eq.s32.totalorder %s26, 1
      %p44 = por %p42, %p43
      %p45 = scmp.ne.s32.totalorder %s34, %s35
      %p46 = scmp.eq.s32.totalorder %s26, 0
      %p47 = por %p45, %p46
      %p48 = scmp.ne.s32.totalorder %s34, %s35
      %p49 = scmp.eq.s32.totalorder %s27, 1
      %p50 = por %p48, %p49
      %p52 = scmp.ne.s32.totalorder %s35, %s51
      %p53 = scmp.eq.s32.totalorder %s27, 0
      %p54 = por %p52, %p53
      %s56 = sadd.s32 %s55, 1
      %p59 = scmp.eq.s32.totalorder %s21, 1
      %p60 = scmp.ne.s32.totalorder %s55, %s57
      %p61 = scmp.eq.s32.totalorder %s21, 0
      %p62 = por %p60, %p61
      %p63 = scmp.ne.s32.totalorder %s55, %s57
      %p64 = scmp.eq.s32.totalorder %s26, 1
      %p65 = por %p63, %p64
      %p66 = scmp.ne.s32.totalorder %s57, %s58
      %p67 = scmp.eq.s32.totalorder %s26, 0
      %p68 = por %p66, %p67
      %p69 = scmp.ne.s32.totalorder %s57, %s58
      %p70 = scmp.eq.s32.totalorder %s27, 1
      %p71 = por %p69, %p70
      %p73 = scmp.ne.s32.totalorder %s58, %s72
      %p74 = scmp.eq.s32.totalorder %s27, 0
      %p75 = por %p73, %p74
      %s77 = sadd.s32 %s76, 1
      %p80 = scmp.eq.s32.totalorder %s21, 1
      %p81 = scmp.ne.s32.totalorder %s76, %s78
      %p82 = scmp.eq.s32.totalorder %s21, 0
      %p83 = por %p81, %p82
      %p84 = scmp.ne.s32.totalorder %s76, %s78
      %p85 = scmp.eq.s32.totalorder %s26, 1
      %p86 = por %p84, %p85
      %p87 = scmp.ne.s32.totalorder %s78, %s79
      %p88 = scmp.eq.s32.totalorder %s26, 0
      %p89 = por %p87, %p88
      %p90 = scmp.ne.s32.totalorder %s78, %s79
      %p91 = scmp.eq.s32.totalorder %s27, 1
      %p92 = por %p90, %p91
      %p94 = scmp.ne.s32.totalorder %s79, %s93
      %p95 = scmp.eq.s32.totalorder %s27, 0
      %p96 = por %p94, %p95
      %s98 = sadd.s32 %s97, 1
      %p101 = scmp.eq.s32.totalorder %s21, 1
      %p102 = scmp.ne.s32.totalorder %s97, %s99
      %p103 = scmp.eq.s32.totalorder %s21, 0
      %p104 = por %p102, %p103
      %p105 = scmp.ne.s32.totalorder %s97, %s99
      %p106 = scmp.eq.s32.totalorder %s26, 1
      %p107 = por %p105, %p106
      %p108 = scmp.ne.s32.totalorder %s99, %s100
      %p109 = scmp.eq.s32.totalorder %s26, 0
      %p110 = por %p108, %p109
      %p111 = scmp.ne.s32.totalorder %s99, %s100
      %p112 = scmp.eq.s32.totalorder %s27, 1
      %p113 = por %p111, %p112
      %p115 = scmp.ne.s32.totalorder %s100, %s114
      %p116 = scmp.eq.s32.totalorder %s27, 0
      %p117 = por %p115, %p116
      %s119 = sadd.s32 %s118, 1
      %p122 = scmp.eq.s32.totalorder %s21, 1
      %p123 = scmp.ne.s32.totalorder %s118, %s120
      %p124 = scmp.eq.s32.totalorder %s21, 0
      %p125 = por %p123, %p124
      %p126 = scmp.ne.s32.totalorder %s118, %s120
      %p127 = scmp.eq.s32.totalorder %s26, 1
      %p128 = por %p126, %p127
      %p129 = scmp.ne.s32.totalorder %s120, %s121
      %p130 = scmp.eq.s32.totalorder %s26, 0
      %p131 = por %p129, %p130
      %p132 = scmp.ne.s32.totalorder %s120, %s121
      %p133 = scmp.eq.s32.totalorder %s27, 1
      %p134 = por %p132, %p133
      %p136 = scmp.ne.s32.totalorder %s121, %s135
      %p137 = scmp.eq.s32.totalorder %s27, 0
      %p138 = por %p136, %p137
      %s140 = sadd.s32 %s139, 1
      %p143 = scmp.eq.s32.totalorder %s21, 1
      %p144 = scmp.ne.s32.totalorder %s139, %s141
      %p145 = scmp.eq.s32.totalorder %s21, 0
      %p146 = por %p144, %p145
      %p147 = scmp.ne.s32.totalorder %s139, %s141
      %p148 = scmp.eq.s32.totalorder %s26, 1
      %p149 = por %p147, %p148
      %p150 = scmp.ne.s32.totalorder %s141, %s142
      %p151 = scmp.eq.s32.totalorder %s26, 0
      %p152 = por %p150, %p151
      %p153 = scmp.ne.s32.totalorder %s141, %s142
      %p154 = scmp.eq.s32.totalorder %s27, 1
      %p155 = por %p153, %p154
      %p157 = scmp.ne.s32.totalorder %s142, %s156
      %p158 = scmp.eq.s32.totalorder %s27, 0
      %p159 = por %p157, %p158
      %s161 = sadd.s32 %s160, 1
      %p164 = scmp.eq.s32.totalorder %s21, 1
      %p165 = scmp.ne.s32.totalorder %s160, %s162
      %p166 = scmp.eq.s32.totalorder %s21, 0
      %p167 = por %p165, %p166
      %p168 = scmp.ne.s32.totalorder %s160, %s162
      %p169 = scmp.eq.s32.totalorder %s26, 1
      %p170 = por %p168, %p169
      %p171 = scmp.ne.s32.totalorder %s162, %s163
      %p172 = scmp.eq.s32.totalorder %s26, 0
      %p173 = por %p171, %p172
      %p174 = scmp.ne.s32.totalorder %s162, %s163
      %p175 = scmp.eq.s32.totalorder %s27, 1
      %p176 = por %p174, %p175
      %p178 = scmp.ne.s32.totalorder %s163, %s177
      %p179 = scmp.eq.s32.totalorder %s27, 0
      %p180 = por %p178, %p179
      %s181 = ssub.s32 %s21, %s28
      %p182 = scmp.eq.s32.totalorder %s181, 0
      %s184 = sadd.s32 %s183, 1
      %s185 = scalar_select %p182, %s183, %s184
      %p188 = pneg %p182
      %p189 = scmp.eq.s32.totalorder %s21, 1
      %p190 = por %p188, %p189
      %p191 = scmp.ne.s32.totalorder %s183, %s186
      %p192 = scmp.eq.s32.totalorder %s21, 0
      %p193 = por %p191, %p192
      %p194 = scmp.ne.s32.totalorder %s183, %s186
      %p195 = scmp.eq.s32.totalorder %s26, 1
      %p196 = por %p194, %p195
      %p197 = scmp.ne.s32.totalorder %s186, %s187
      %p198 = scmp.eq.s32.totalorder %s26, 0
      %p199 = por %p197, %p198
      %p200 = scmp.ne.s32.totalorder %s186, %s187
      %p201 = scmp.eq.s32.totalorder %s27, 1
      %p202 = por %p200, %p201
      %p204 = scmp.ne.s32.totalorder %s187, %s203
      %p205 = scmp.eq.s32.totalorder %s27, 0
      %p206 = por %p204, %p205
      %p207 = scmp.le.s32.totalorder 1, %s21
      %p208 = scmp.lt.s32.totalorder %s21, 3
      %p209 = pnand %p207, %p208
      %p210 = pneg %p209
      // Predicated region
      $region9: #{tpu_custom_call.1} parent=5 // pred_check
        _
      $region10: #{tpu_custom_call.1} parent=5 // pred_check_branch
        %212 = sbr.rel (%p209) target = $region12
      $region11: #{tpu_custom_call.1} parent=5 // pred_region
        %s213 = ssub.s32 %s21, 1
        // Predicated region
        $region13: #{tpu_custom_call.1} parent=11 // pred_check
          %p214 = pneg %p68
        $region14: #{tpu_custom_call.1} parent=11 // pred_check_branch
          %216 = sbr.rel (%p214) target = $region16
        $region15: #{tpu_custom_call.1} parent=11 // pred_region
          %s218 = ssub.s32 2048, 2048
          %219 = vsyncadd [#allocation6], %s218
          %s220 = sshll.u32 [#allocation5], 4
          %s221 = int_to_ptr.vmem [resolvable:$true] %s220
          %226 = dma.hbm_to_vmem [thread:$0]  %s1, 2048, %s221, [#allocation6], 128, 128, 8
        $region16: #{tpu_custom_call.1} parent=11 // pred_fallthru
          _
        // Predicated region
        $region17: #{tpu_custom_call.1} parent=11 // pred_check
          %p227 = pneg %p89
        $region18: #{tpu_custom_call.1} parent=11 // pred_check_branch
          %229 = sbr.rel (%p227) target = $region20
        $region19: #{tpu_custom_call.1} parent=11 // pred_region
          _
        $region20: #{tpu_custom_call.1} parent=11 // pred_fallthru
          _
        // Predicated region
        $region21: #{tpu_custom_call.1} parent=11 // pred_check
          %p230 = pneg %p110
        $region22: #{tpu_custom_call.1} parent=11 // pred_check_branch
          %232 = sbr.rel (%p230) target = $region24
        $region23: #{tpu_custom_call.1} parent=11 // pred_region
          %s234 = ssub.s32 2048, 2048
          %235 = vsyncadd [#allocation6], %s234
          %s236 = sshll.u32 [#allocation7], 4
          %s237 = int_to_ptr.vmem [resolvable:$true] %s236
          %242 = dma.hbm_to_vmem [thread:$0]  %s3, 2048, %s237, [#allocation6], 128, 128, 8
        $region24: #{tpu_custom_call.1} parent=11 // pred_fallthru
          _
        // Predicated region
        $region25: #{tpu_custom_call.1} parent=11 // pred_check
          %p243 = pneg %p131
        $region26: #{tpu_custom_call.1} parent=11 // pred_check_branch
          %245 = sbr.rel (%p243) target = $region28
        $region27: #{tpu_custom_call.1} parent=11 // pred_region
          _
        $region28: #{tpu_custom_call.1} parent=11 // pred_fallthru
          _
        // Predicated region
        $region29: #{tpu_custom_call.1} parent=11 // pred_check
          %p246 = pneg %p152
        $region30: #{tpu_custom_call.1} parent=11 // pred_check_branch
          %248 = sbr.rel (%p246) target = $region32
        $region31: #{tpu_custom_call.1} parent=11 // pred_region
          %s250 = ssub.s32 2048, 2048
          %251 = vsyncadd [#allocation9], %s250
          %s252 = sshll.u32 [#allocation8], 4
          %s253 = int_to_ptr.vmem [resolvable:$true] %s252
          %258 = dma.hbm_to_vmem [thread:$0]  %s5, 2048, %s253, [#allocation9], 128, 128, 8
        $region32: #{tpu_custom_call.1} parent=11 // pred_fallthru
          _
        // Predicated region
        $region33: #{tpu_custom_call.1} parent=11 // pred_check
          %p259 = pneg %p173
        $region34: #{tpu_custom_call.1} parent=11 // pred_check_branch
          %261 = sbr.rel (%p259) target = $region36
        $region35: #{tpu_custom_call.1} parent=11 // pred_region
          _
        $region36: #{tpu_custom_call.1} parent=11 // pred_fallthru
          _
      $region12: #{tpu_custom_call.1} parent=5 // pred_fallthru
        _
      %p262 = scmp.lt.s32.totalorder %s21, 2
      // Predicated region
      $region37: #{tpu_custom_call.1} parent=5 // pred_check
        %p263 = pneg %p262
      $region38: #{tpu_custom_call.1} parent=5 // pred_check_branch
        %265 = sbr.rel (%p263) target = $region40
      $region39: #{tpu_custom_call.1} parent=5 // pred_region
        // Predicated region
        $region41: #{tpu_custom_call.1} parent=39 // pred_check
          %p266 = pneg %p41
        $region42: #{tpu_custom_call.1} parent=39 // pred_check_branch
          %268 = sbr.rel (%p266) target = $region44
        $region43: #{tpu_custom_call.1} parent=39 // pred_region
          %s269 = sand.u32 %s31, 1
          %s270 = scalar_lea.sflag [#allocation3], %s269
          %s271 = sand.u32 %s31, 1
          %s272 = smul.addr %s271, 160
          %s273 = scalar_lea.vmem [#allocation2], %s272
          %s274 = smul.u32 20, %s21
          %s276 = ssub.s32 2560, 2560
          %277 = vsyncadd %s270, %s276
          %s278 = smul.addr %s274, 128
          %s279 = scalar_lea.hbm %s0, %s278
          %s280 = sshll.u32 %s273, 4
          %s281 = int_to_ptr.vmem [resolvable:$true] %s280
          %286 = dma.hbm_to_vmem [thread:$0]  %s279, 2560, %s281, %s270, 128, 128, 8
        $region44: #{tpu_custom_call.1} parent=39 // pred_fallthru
          _
      $region40: #{tpu_custom_call.1} parent=5 // pred_fallthru
        _
      %p287 = scmp.le.s32.totalorder 1, %s21
      %p288 = scmp.lt.s32.totalorder %s21, 3
      %p289 = pnand %p287, %p288
      %p290 = pneg %p289
      // Predicated region
      $region45: #{tpu_custom_call.1} parent=5 // pred_check
        _
      $region46: #{tpu_custom_call.1} parent=5 // pred_check_branch
        %292 = sbr.rel (%p289) target = $region48
      $region47: #{tpu_custom_call.1} parent=5 // pred_region
        %s293 = ssub.s32 %s21, 1
        %s294 = sand.u32 %s34, 1
        %s295 = scalar_lea.sflag [#allocation3], %s294
        %s296 = sand.u32 %s34, 1
        %s297 = smul.addr %s296, 160
        %s298 = scalar_lea.vmem [#allocation2], %s297
        // Predicated region
        $region49: #{tpu_custom_call.1} parent=47 // pred_check
          %p299 = pneg %p47
        $region50: #{tpu_custom_call.1} parent=47 // pred_check_branch
          %301 = sbr.rel (%p299) target = $region52
        $region51: #{tpu_custom_call.1} parent=47 // pred_region
          %302 = dma.done %s295, 2560
        $region52: #{tpu_custom_call.1} parent=47 // pred_fallthru
          _
        // Predicated region
        $region53: #{tpu_custom_call.1} parent=47 // pred_check
          %p303 = pneg %p68
        $region54: #{tpu_custom_call.1} parent=47 // pred_check_branch
          %305 = sbr.rel (%p303) target = $region56
        $region55: #{tpu_custom_call.1} parent=47 // pred_region
          %306 = dma.done [#allocation6], 2048
        $region56: #{tpu_custom_call.1} parent=47 // pred_fallthru
          _
        // Predicated region
        $region57: #{tpu_custom_call.1} parent=47 // pred_check
          %p307 = pneg %p110
        $region58: #{tpu_custom_call.1} parent=47 // pred_check_branch
          %309 = sbr.rel (%p307) target = $region60
        $region59: #{tpu_custom_call.1} parent=47 // pred_region
          %310 = dma.done [#allocation6], 2048
        $region60: #{tpu_custom_call.1} parent=47 // pred_fallthru
          _
        // Predicated region
        $region61: #{tpu_custom_call.1} parent=47 // pred_check
          %p311 = pneg %p152
        $region62: #{tpu_custom_call.1} parent=47 // pred_check_branch
          %313 = sbr.rel (%p311) target = $region64
        $region63: #{tpu_custom_call.1} parent=47 // pred_region
          %314 = dma.done [#allocation9], 2048
        $region64: #{tpu_custom_call.1} parent=47 // pred_fallthru
          _
        %s315 = sand.u32 %s34, 1
        %s316 = scalar_lea.sflag [#allocation3], %s315
        %s317 = sand.u32 %s34, 1
        %s318 = smul.addr %s317, 160
        %s319 = scalar_lea.vmem [#allocation2], %s318
        %p320 = pneg %p47
        %p321 = pneg %p44
        %p322 = pneg %p68
        %p323 = pneg %p65
        %p324 = pneg %p89
        %p325 = pneg %p86
        %p326 = pneg %p110
        %p327 = pneg %p107
        %p328 = pneg %p131
        %p329 = pneg %p128
        %p330 = pneg %p152
        %p331 = pneg %p149
        %p332 = pneg %p173
        %p333 = pneg %p170
        %p334 = pneg %p199
        %p335 = pneg %p196
        %s336 = sand.u32 %s186, 1
        %s337 = scalar_lea.sflag [#allocation4], %s336
        %s338 = sand.u32 %s186, 1
        %s339 = smul.addr %s338, 160
        %s340 = scalar_lea.vmem [#allocation10], %s339
        %s341 = smul.u32 20, %s26
        %s342 = smul.u32 20, %s26
        %v343 = vld [vmem:[%s298] sm:$0xff]
        %v344 = vld [vmem:[%s298 + $0x8] sm:$0xff]
        %v345 = vld [vmem:[%s298 + $0x10] sm:$0xff]
        %v346 = vld [vmem:[%s298 + $0x18] sm:$0xff]
        %v347 = vld [vmem:[%s298 + $0x20] sm:$0xff]
        %v348 = vld [vmem:[%s298 + $0x28] sm:$0xff]
        %v349 = vld [vmem:[%s298 + $0x30] sm:$0xff]
        %v350 = vld [vmem:[%s298 + $0x38] sm:$0xff]
        %v351 = vld [vmem:[%s298 + $0x40] sm:$0xff]
        %v352 = vld [vmem:[%s298 + $0x48] sm:$0xff]
        %v353 = vld [vmem:[%s298 + $0x50] sm:$0xff]
        %v354 = vld [vmem:[%s298 + $0x58] sm:$0xff]
        %v355 = vld [vmem:[%s298 + $0x60] sm:$0xff]
        %v356 = vld [vmem:[%s298 + $0x68] sm:$0xff]
        %v357 = vld [vmem:[%s298 + $0x70] sm:$0xff]
        %v358 = vld [vmem:[%s298 + $0x78] sm:$0xff]
        %v359 = vld [vmem:[%s298 + $0x80] sm:$0xff]
        %v360 = vld [vmem:[%s298 + $0x88] sm:$0xff]
        %v361 = vld [vmem:[%s298 + $0x90] sm:$0xff]
        %v362 = vld [vmem:[%s298 + $0x98] sm:$0xff]
        %v363 = vld [vmem:[#allocation5] sm:$0xff]
        %v364 = vld [vmem:[#allocation5 + $0x8] sm:$0xff]
        %v365 = vld [vmem:[#allocation5 + $0x10] sm:$0xff]
        %v366 = vld [vmem:[#allocation5 + $0x18] sm:$0xff]
        %v367 = vld [vmem:[#allocation5 + $0x20] sm:$0xff]
        %v368 = vld [vmem:[#allocation5 + $0x28] sm:$0xff]
        %v369 = vld [vmem:[#allocation5 + $0x30] sm:$0xff]
        %v370 = vld [vmem:[#allocation5 + $0x38] sm:$0xff]
        %v371 = vld [vmem:[#allocation5 + $0x40] sm:$0xff]
        %v372 = vld [vmem:[#allocation5 + $0x48] sm:$0xff]
        %v373 = vld [vmem:[#allocation5 + $0x50] sm:$0xff]
        %v374 = vld [vmem:[#allocation5 + $0x58] sm:$0xff]
        %v375 = vld [vmem:[#allocation5 + $0x60] sm:$0xff]
        %v376 = vld [vmem:[#allocation5 + $0x68] sm:$0xff]
        %v377 = vld [vmem:[#allocation5 + $0x70] sm:$0xff]
        %v378 = vld [vmem:[#allocation5 + $0x78] sm:$0xff]
        %v379 = vld [vmem:[%s2] sm:$0x1]
        %v381 = vlaneseq
        %v382 = vshrl.u32 %v381, 7
        %v383 = vsub.s32 0, %v382
        %v384 = vrot.slane %v379, %v383
        %386 = vmatprep.subr.mxu0 0.0
        %387 = vmatpush1.msra.mxu0 %v363
        %388 = vmatprep.subr.mxu0 0.0
        %389 = vmatpush1.msra.mxu0 %v364
        %390 = vmatprep.subr.mxu0 0.0
        %391 = vmatpush1.msra.mxu0 %v365
        %392 = vmatprep.subr.mxu0 0.0
        %393 = vmatpush1.msra.mxu0 %v366
        %394 = vmatprep.subr.mxu0 0.0
        %395 = vmatpush1.msra.mxu0 %v367
        %396 = vmatprep.subr.mxu0 0.0
        %397 = vmatpush1.msra.mxu0 %v368
        %398 = vmatprep.subr.mxu0 0.0
        %399 = vmatpush1.msra.mxu0 %v369
        %400 = vmatprep.subr.mxu0 0.0
        %401 = vmatpush1.msra.mxu0 %v370
        %402 = vmatprep.subr.mxu0 0.0
        %403 = vmatpush1.msra.mxu0 %v371
        %404 = vmatprep.subr.mxu0 0.0
        %405 = vmatpush1.msra.mxu0 %v372
        %406 = vmatprep.subr.mxu0 0.0
        %407 = vmatpush1.msra.mxu0 %v373
        %408 = vmatprep.subr.mxu0 0.0
        %409 = vmatpush1.msra.mxu0 %v374
        %410 = vmatprep.subr.mxu0 0.0
        %411 = vmatpush1.msra.mxu0 %v375
        %412 = vmatprep.subr.mxu0 0.0
        %413 = vmatpush1.msra.mxu0 %v376
        %414 = vmatprep.subr.mxu0 0.0
        %415 = vmatpush1.msra.mxu0 %v377
        %416 = vmatprep.subr.mxu0 0.0
        %417 = vmatpush1.msra.mxu0 %v378
        %418 = vmatprep.subr.mxu0 0.0
        %419 = vmatpush1.msra.mxu0 0.0
        %420 = vmatprep.subr.mxu0 0.0
        %421 = vmatpush1.msra.mxu0 0.0
        %422 = vmatprep.subr.mxu0 0.0
        %423 = vmatpush1.msra.mxu0 0.0
        %424 = vmatprep.subr.mxu0 0.0
        %425 = vmatpush1.msra.mxu0 0.0
        %426 = vmatprep.subr.mxu0 0.0
        %427 = vmatpush1.msra.mxu0 0.0
        %428 = vmatprep.subr.mxu0 0.0
        %429 = vmatpush1.msra.mxu0 0.0
        %430 = vmatprep.subr.mxu0 0.0
        %431 = vmatpush1.msra.mxu0 0.0
        %432 = vmatprep.subr.mxu0 0.0
        %433 = vmatpush1.msra.mxu0 0.0
        %434 = vmatprep.subr.mxu0 0.0
        %435 = vmatpush1.msra.mxu0 0.0
        %436 = vmatprep.subr.mxu0 0.0
        %437 = vmatpush1.msra.mxu0 0.0
        %438 = vmatprep.subr.mxu0 0.0
        %439 = vmatpush1.msra.mxu0 0.0
        %440 = vmatprep.subr.mxu0 0.0
        %441 = vmatpush1.msra.mxu0 0.0
        %442 = vmatprep.subr.mxu0 0.0
        %443 = vmatpush1.msra.mxu0 0.0
        %444 = vmatprep.subr.mxu0 0.0
        %445 = vmatpush1.msra.mxu0 0.0
        %446 = vmatprep.subr.mxu0 0.0
        %447 = vmatpush1.msra.mxu0 0.0
        %448 = vmatprep.subr.mxu0 0.0
        %449 = vmatpush1.msra.mxu0 0.0
        %450 = vmatprep.mubr.f32.mxu0 0.0
        %451 = vmatmul.mubr.f32.gmra.mrb[0].mxu0 %v343
        %v452 = vpop.f32.mrb[0].mxu0
        %v453 = vadd.f32 %v384, %v452
        %v454 = vpop.f32.mrb[0].mxu0
        %455 = vmatprep.mubr.f32.mxu0 0.0
        %456 = vmatmul.mubr.f32.gmra.mrb[0].mxu0 %v344
        %v457 = vpop.f32.mrb[0].mxu0
        %v458 = vadd.f32 %v384, %v457
        %v459 = vpop.f32.mrb[0].mxu0
        %460 = vmatprep.mubr.f32.mxu0 0.0
        %461 = vmatmul.mubr.f32.gmra.mrb[0].mxu0 %v345
        %v462 = vpop.f32.mrb[0].mxu0
        %v463 = vadd.f32 %v384, %v462
        %v464 = vpop.f32.mrb[0].mxu0
        %465 = vmatprep.mubr.f32.mxu0 0.0
        %466 = vmatmul.mubr.f32.gmra.mrb[0].mxu0 %v346
        %v467 = vpop.f32.mrb[0].mxu0
        %v468 = vadd.f32 %v384, %v467
        %v469 = vpop.f32.mrb[0].mxu0
        %470 = vmatprep.mubr.f32.mxu0 0.0
        %471 = vmatmul.mubr.f32.gmra.mrb[0].mxu0 %v347
        %v472 = vpop.f32.mrb[0].mxu0
        %v473 = vadd.f32 %v384, %v472
        %v474 = vpop.f32.mrb[0].mxu0
        %475 = vmatprep.mubr.f32.mxu0 0.0
        %476 = vmatmul.mubr.f32.gmra.mrb[0].mxu0 %v348
        %v477 = vpop.f32.mrb[0].mxu0
        %v478 = vadd.f32 %v384, %v477
        %v479 = vpop.f32.mrb[0].mxu0
        %480 = vmatprep.mubr.f32.mxu0 0.0
        %481 = vmatmul.mubr.f32.gmra.mrb[0].mxu0 %v349
        %v482 = vpop.f32.mrb[0].mxu0
        %v483 = vadd.f32 %v384, %v482
        %v484 = vpop.f32.mrb[0].mxu0
        %485 = vmatprep.mubr.f32.mxu0 0.0
        %486 = vmatmul.mubr.f32.gmra.mrb[0].mxu0 %v350
        %v487 = vpop.f32.mrb[0].mxu0
        %v488 = vadd.f32 %v384, %v487
        %v489 = vpop.f32.mrb[0].mxu0
        %490 = vmatprep.mubr.f32.mxu0 0.0
        %491 = vmatmul.mubr.f32.gmra.mrb[0].mxu0 %v351
        %v492 = vpop.f32.mrb[0].mxu0
        %v493 = vadd.f32 %v384, %v492
        %v494 = vpop.f32.mrb[0].mxu0
        %495 = vmatprep.mubr.f32.mxu0 0.0
        %496 = vmatmul.mubr.f32.gmra.mrb[0].mxu0 %v352
        %v497 = vpop.f32.mrb[0].mxu0
        %v498 = vadd.f32 %v384, %v497
        %v499 = vpop.f32.mrb[0].mxu0
        %500 = vmatprep.mubr.f32.mxu0 0.0
        %501 = vmatmul.mubr.f32.gmra.mrb[0].mxu0 %v353
        %v502 = vpop.f32.mrb[0].mxu0
        %v503 = vadd.f32 %v384, %v502
        %v504 = vpop.f32.mrb[0].mxu0
        %505 = vmatprep.mubr.f32.mxu0 0.0
        %506 = vmatmul.mubr.f32.gmra.mrb[0].mxu0 %v354
        %v507 = vpop.f32.mrb[0].mxu0
        %v508 = vadd.f32 %v384, %v507
        %v509 = vpop.f32.mrb[0].mxu0
        %510 = vmatprep.mubr.f32.mxu0 0.0
        %511 = vmatmul.mubr.f32.gmra.mrb[0].mxu0 %v355
        %v512 = vpop.f32.mrb[0].mxu0
        %v513 = vadd.f32 %v384, %v512
        %v514 = vpop.f32.mrb[0].mxu0
        %515 = vmatprep.mubr.f32.mxu0 0.0
        %516 = vmatmul.mubr.f32.gmra.mrb[0].mxu0 %v356
        %v517 = vpop.f32.mrb[0].mxu0
        %v518 = vadd.f32 %v384, %v517
        %v519 = vpop.f32.mrb[0].mxu0
        %520 = vmatprep.mubr.f32.mxu0 0.0
        %521 = vmatmul.mubr.f32.gmra.mrb[0].mxu0 %v357
        %v522 = vpop.f32.mrb[0].mxu0
        %v523 = vadd.f32 %v384, %v522
        %v524 = vpop.f32.mrb[0].mxu0
        %525 = vmatprep.mubr.f32.mxu0 0.0
        %526 = vmatmul.mubr.f32.gmra.mrb[0].mxu0 %v358
        %v527 = vpop.f32.mrb[0].mxu0
        %v528 = vadd.f32 %v384, %v527
        %v529 = vpop.f32.mrb[0].mxu0
        %530 = vmatprep.mubr.f32.mxu0 0.0
        %531 = vmatmul.mubr.f32.gmra.mrb[0].mxu0 %v359
        %v532 = vpop.f32.mrb[0].mxu0
        %v533 = vadd.f32 %v384, %v532
        %v534 = vpop.f32.mrb[0].mxu0
        %535 = vmatprep.mubr.f32.mxu0 0.0
        %536 = vmatmul.mubr.f32.gmra.mrb[0].mxu0 %v360
        %v537 = vpop.f32.mrb[0].mxu0
        %v538 = vadd.f32 %v384, %v537
        %v539 = vpop.f32.mrb[0].mxu0
        %540 = vmatprep.mubr.f32.mxu0 0.0
        %541 = vmatmul.mubr.f32.gmra.mrb[0].mxu0 %v361
        %v542 = vpop.f32.mrb[0].mxu0
        %v543 = vadd.f32 %v384, %v542
        %v544 = vpop.f32.mrb[0].mxu0
        %545 = vmatprep.mubr.f32.mxu0 0.0
        %546 = vmatmul.mubr.f32.gmra.mrb[0].mxu0 %v362
        %v547 = vpop.f32.mrb[0].mxu0
        %v548 = vadd.f32 %v384, %v547
        %v549 = vpop.f32.mrb[0].mxu0
        %550 = vdwg.mxu0
        %v551 = vmax.f32 %v453, 0.0
        %v552 = vmax.f32 %v458, 0.0
        %v553 = vmax.f32 %v463, 0.0
        %v554 = vmax.f32 %v468, 0.0
        %v555 = vmax.f32 %v473, 0.0
        %v556 = vmax.f32 %v478, 0.0
        %v557 = vmax.f32 %v483, 0.0
        %v558 = vmax.f32 %v488, 0.0
        %v559 = vmax.f32 %v493, 0.0
        %v560 = vmax.f32 %v498, 0.0
        %v561 = vmax.f32 %v503, 0.0
        %v562 = vmax.f32 %v508, 0.0
        %v563 = vmax.f32 %v513, 0.0
        %v564 = vmax.f32 %v518, 0.0
        %v565 = vmax.f32 %v523, 0.0
        %v566 = vmax.f32 %v528, 0.0
        %v567 = vmax.f32 %v533, 0.0
        %v568 = vmax.f32 %v538, 0.0
        %v569 = vmax.f32 %v543, 0.0
        %v570 = vmax.f32 %v548, 0.0
        %v571 = vld [vmem:[#allocation7] sm:$0xff]
        %v572 = vld [vmem:[#allocation7 + $0x8] sm:$0xff]
        %v573 = vld [vmem:[#allocation7 + $0x10] sm:$0xff]
        %v574 = vld [vmem:[#allocation7 + $0x18] sm:$0xff]
        %v575 = vld [vmem:[#allocation7 + $0x20] sm:$0xff]
        %v576 = vld [vmem:[#allocation7 + $0x28] sm:$0xff]
        %v577 = vld [vmem:[#allocation7 + $0x30] sm:$0xff]
        %v578 = vld [vmem:[#allocation7 + $0x38] sm:$0xff]
        %v579 = vld [vmem:[#allocation7 + $0x40] sm:$0xff]
        %v580 = vld [vmem:[#allocation7 + $0x48] sm:$0xff]
        %v581 = vld [vmem:[#allocation7 + $0x50] sm:$0xff]
        %v582 = vld [vmem:[#allocation7 + $0x58] sm:$0xff]
        %v583 = vld [vmem:[#allocation7 + $0x60] sm:$0xff]
        %v584 = vld [vmem:[#allocation7 + $0x68] sm:$0xff]
        %v585 = vld [vmem:[#allocation7 + $0x70] sm:$0xff]
        %v586 = vld [vmem:[#allocation7 + $0x78] sm:$0xff]
        %v587 = vld [vmem:[%s4] sm:$0x1]
        %v589 = vlaneseq
        %v590 = vshrl.u32 %v589, 7
        %v591 = vsub.s32 0, %v590
        %v592 = vrot.slane %v587, %v591
        %594 = vmatprep.subr.mxu0 0.0
        %595 = vmatpush1.msra.mxu0 %v571
        %596 = vmatprep.subr.mxu0 0.0
        %597 = vmatpush1.msra.mxu0 %v572
        %598 = vmatprep.subr.mxu0 0.0
        %599 = vmatpush1.msra.mxu0 %v573
        %600 = vmatprep.subr.mxu0 0.0
        %601 = vmatpush1.msra.mxu0 %v574
        %602 = vmatprep.subr.mxu0 0.0
        %603 = vmatpush1.msra.mxu0 %v575
        %604 = vmatprep.subr.mxu0 0.0
        %605 = vmatpush1.msra.mxu0 %v576
        %606 = vmatprep.subr.mxu0 0.0
        %607 = vmatpush1.msra.mxu0 %v577
        %608 = vmatprep.subr.mxu0 0.0
        %609 = vmatpush1.msra.mxu0 %v578
        %610 = vmatprep.subr.mxu0 0.0
        %611 = vmatpush1.msra.mxu0 %v579
        %612 = vmatprep.subr.mxu0 0.0
        %613 = vmatpush1.msra.mxu0 %v580
        %614 = vmatprep.subr.mxu0 0.0
        %615 = vmatpush1.msra.mxu0 %v581
        %616 = vmatprep.subr.mxu0 0.0
        %617 = vmatpush1.msra.mxu0 %v582
        %618 = vmatprep.subr.mxu0 0.0
        %619 = vmatpush1.msra.mxu0 %v583
        %620 = vmatprep.subr.mxu0 0.0
        %621 = vmatpush1.msra.mxu0 %v584
        %622 = vmatprep.subr.mxu0 0.0
        %623 = vmatpush1.msra.mxu0 %v585
        %624 = vmatprep.subr.mxu0 0.0
        %625 = vmatpush1.msra.mxu0 %v586
        %626 = vmatprep.subr.mxu0 0.0
        %627 = vmatpush1.msra.mxu0 0.0
        %628 = vmatprep.subr.mxu0 0.0
        %629 = vmatpush1.msra.mxu0 0.0
        %630 = vmatprep.subr.mxu0 0.0
        %631 = vmatpush1.msra.mxu0 0.0
        %632 = vmatprep.subr.mxu0 0.0
        %633 = vmatpush1.msra.mxu0 0.0
        %634 = vmatprep.subr.mxu0 0.0
        %635 = vmatpush1.msra.mxu0 0.0
        %636 = vmatprep.subr.mxu0 0.0
        %637 = vmatpush1.msra.mxu0 0.0
        %638 = vmatprep.subr.mxu0 0.0
        %639 = vmatpush1.msra.mxu0 0.0
        %640 = vmatprep.subr.mxu0 0.0
        %641 = vmatpush1.msra.mxu0 0.0
        %642 = vmatprep.subr.mxu0 0.0
        %643 = vmatpush1.msra.mxu0 0.0
        %644 = vmatprep.subr.mxu0 0.0
        %645 = vmatpush1.msra.mxu0 0.0
        %646 = vmatprep.subr.mxu0 0.0
        %647 = vmatpush1.msra.mxu0 0.0
        %648 = vmatprep.subr.mxu0 0.0
        %649 = vmatpush1.msra.mxu0 0.0
        %650 = vmatprep.subr.mxu0 0.0
        %651 = vmatpush1.msra.mxu0 0.0
        %652 = vmatprep.subr.mxu0 0.0
        %653 = vmatpush1.msra.mxu0 0.0
        %654 = vmatprep.subr.mxu0 0.0
        %655 = vmatpush1.msra.mxu0 0.0
        %656 = vmatprep.subr.mxu0 0.0
        %657 = vmatpush1.msra.mxu0 0.0
        %658 = vmatprep.mubr.f32.mxu0 0.0
        %659 = vmatmul.mubr.f32.gmra.mrb[0].mxu0 %v551
        %v660 = vpop.f32.mrb[0].mxu0
        %v661 = vadd.f32 %v592, %v660
        %v662 = vpop.f32.mrb[0].mxu0
        %663 = vmatprep.mubr.f32.mxu0 0.0
        %664 = vmatmul.mubr.f32.gmra.mrb[0].mxu0 %v552
        %v665 = vpop.f32.mrb[0].mxu0
        %v666 = vadd.f32 %v592, %v665
        %v667 = vpop.f32.mrb[0].mxu0
        %668 = vmatprep.mubr.f32.mxu0 0.0
        %669 = vmatmul.mubr.f32.gmra.mrb[0].mxu0 %v553
        %v670 = vpop.f32.mrb[0].mxu0
        %v671 = vadd.f32 %v592, %v670
        %v672 = vpop.f32.mrb[0].mxu0
        %673 = vmatprep.mubr.f32.mxu0 0.0
        %674 = vmatmul.mubr.f32.gmra.mrb[0].mxu0 %v554
        %v675 = vpop.f32.mrb[0].mxu0
        %v676 = vadd.f32 %v592, %v675
        %v677 = vpop.f32.mrb[0].mxu0
        %678 = vmatprep.mubr.f32.mxu0 0.0
        %679 = vmatmul.mubr.f32.gmra.mrb[0].mxu0 %v555
        %v680 = vpop.f32.mrb[0].mxu0
        %v681 = vadd.f32 %v592, %v680
        %v682 = vpop.f32.mrb[0].mxu0
        %683 = vmatprep.mubr.f32.mxu0 0.0
        %684 = vmatmul.mubr.f32.gmra.mrb[0].mxu0 %v556
        %v685 = vpop.f32.mrb[0].mxu0
        %v686 = vadd.f32 %v592, %v685
        %v687 = vpop.f32.mrb[0].mxu0
        %688 = vmatprep.mubr.f32.mxu0 0.0
        %689 = vmatmul.mubr.f32.gmra.mrb[0].mxu0 %v557
        %v690 = vpop.f32.mrb[0].mxu0
        %v691 = vadd.f32 %v592, %v690
        %v692 = vpop.f32.mrb[0].mxu0
        %693 = vmatprep.mubr.f32.mxu0 0.0
        %694 = vmatmul.mubr.f32.gmra.mrb[0].mxu0 %v558
        %v695 = vpop.f32.mrb[0].mxu0
        %v696 = vadd.f32 %v592, %v695
        %v697 = vpop.f32.mrb[0].mxu0
        %698 = vmatprep.mubr.f32.mxu0 0.0
        %699 = vmatmul.mubr.f32.gmra.mrb[0].mxu0 %v559
        %v700 = vpop.f32.mrb[0].mxu0
        %v701 = vadd.f32 %v592, %v700
        %v702 = vpop.f32.mrb[0].mxu0
        %703 = vmatprep.mubr.f32.mxu0 0.0
        %704 = vmatmul.mubr.f32.gmra.mrb[0].mxu0 %v560
        %v705 = vpop.f32.mrb[0].mxu0
        %v706 = vadd.f32 %v592, %v705
        %v707 = vpop.f32.mrb[0].mxu0
        %708 = vmatprep.mubr.f32.mxu0 0.0
        %709 = vmatmul.mubr.f32.gmra.mrb[0].mxu0 %v561
        %v710 = vpop.f32.mrb[0].mxu0
        %v711 = vadd.f32 %v592, %v710
        %v712 = vpop.f32.mrb[0].mxu0
        %713 = vmatprep.mubr.f32.mxu0 0.0
        %714 = vmatmul.mubr.f32.gmra.mrb[0].mxu0 %v562
        %v715 = vpop.f32.mrb[0].mxu0
        %v716 = vadd.f32 %v592, %v715
        %v717 = vpop.f32.mrb[0].mxu0
        %718 = vmatprep.mubr.f32.mxu0 0.0
        %719 = vmatmul.mubr.f32.gmra.mrb[0].mxu0 %v563
        %v720 = vpop.f32.mrb[0].mxu0
        %v721 = vadd.f32 %v592, %v720
        %v722 = vpop.f32.mrb[0].mxu0
        %723 = vmatprep.mubr.f32.mxu0 0.0
        %724 = vmatmul.mubr.f32.gmra.mrb[0].mxu0 %v564
        %v725 = vpop.f32.mrb[0].mxu0
        %v726 = vadd.f32 %v592, %v725
        %v727 = vpop.f32.mrb[0].mxu0
        %728 = vmatprep.mubr.f32.mxu0 0.0
        %729 = vmatmul.mubr.f32.gmra.mrb[0].mxu0 %v565
        %v730 = vpop.f32.mrb[0].mxu0
        %v731 = vadd.f32 %v592, %v730
        %v732 = vpop.f32.mrb[0].mxu0
        %733 = vmatprep.mubr.f32.mxu0 0.0
        %734 = vmatmul.mubr.f32.gmra.mrb[0].mxu0 %v566
        %v735 = vpop.f32.mrb[0].mxu0
        %v736 = vadd.f32 %v592, %v735
        %v737 = vpop.f32.mrb[0].mxu0
        %738 = vmatprep.mubr.f32.mxu0 0.0
        %739 = vmatmul.mubr.f32.gmra.mrb[0].mxu0 %v567
        %v740 = vpop.f32.mrb[0].mxu0
        %v741 = vadd.f32 %v592, %v740
        %v742 = vpop.f32.mrb[0].mxu0
        %743 = vmatprep.mubr.f32.mxu0 0.0
        %744 = vmatmul.mubr.f32.gmra.mrb[0].mxu0 %v568
        %v745 = vpop.f32.mrb[0].mxu0
        %v746 = vadd.f32 %v592, %v745
        %v747 = vpop.f32.mrb[0].mxu0
        %748 = vmatprep.mubr.f32.mxu0 0.0
        %749 = vmatmul.mubr.f32.gmra.mrb[0].mxu0 %v569
        %v750 = vpop.f32.mrb[0].mxu0
        %v751 = vadd.f32 %v592, %v750
        %v752 = vpop.f32.mrb[0].mxu0
        %753 = vmatprep.mubr.f32.mxu0 0.0
        %754 = vmatmul.mubr.f32.gmra.mrb[0].mxu0 %v570
        %v755 = vpop.f32.mrb[0].mxu0
        %v756 = vadd.f32 %v592, %v755
        %v757 = vpop.f32.mrb[0].mxu0
        %758 = vdwg.mxu0
        %v759 = vmax.f32 %v661, 0.0
        %v760 = vmax.f32 %v666, 0.0
        %v761 = vmax.f32 %v671, 0.0
        %v762 = vmax.f32 %v676, 0.0
        %v763 = vmax.f32 %v681, 0.0
        %v764 = vmax.f32 %v686, 0.0
        %v765 = vmax.f32 %v691, 0.0
        %v766 = vmax.f32 %v696, 0.0
        %v767 = vmax.f32 %v701, 0.0
        %v768 = vmax.f32 %v706, 0.0
        %v769 = vmax.f32 %v711, 0.0
        %v770 = vmax.f32 %v716, 0.0
        %v771 = vmax.f32 %v721, 0.0
        %v772 = vmax.f32 %v726, 0.0
        %v773 = vmax.f32 %v731, 0.0
        %v774 = vmax.f32 %v736, 0.0
        %v775 = vmax.f32 %v741, 0.0
        %v776 = vmax.f32 %v746, 0.0
        %v777 = vmax.f32 %v751, 0.0
        %v778 = vmax.f32 %v756, 0.0
        %v779 = vld [vmem:[#allocation8] sm:$0xff]
        %v780 = vld [vmem:[#allocation8 + $0x8] sm:$0xff]
        %v781 = vld [vmem:[#allocation8 + $0x10] sm:$0xff]
        %v782 = vld [vmem:[#allocation8 + $0x18] sm:$0xff]
        %v783 = vld [vmem:[#allocation8 + $0x20] sm:$0xff]
        %v784 = vld [vmem:[#allocation8 + $0x28] sm:$0xff]
        %v785 = vld [vmem:[#allocation8 + $0x30] sm:$0xff]
        %v786 = vld [vmem:[#allocation8 + $0x38] sm:$0xff]
        %v787 = vld [vmem:[#allocation8 + $0x40] sm:$0xff]
        %v788 = vld [vmem:[#allocation8 + $0x48] sm:$0xff]
        %v789 = vld [vmem:[#allocation8 + $0x50] sm:$0xff]
        %v790 = vld [vmem:[#allocation8 + $0x58] sm:$0xff]
        %v791 = vld [vmem:[#allocation8 + $0x60] sm:$0xff]
        %v792 = vld [vmem:[#allocation8 + $0x68] sm:$0xff]
        %v793 = vld [vmem:[#allocation8 + $0x70] sm:$0xff]
        %v794 = vld [vmem:[#allocation8 + $0x78] sm:$0xff]
        %v795 = vld [vmem:[%s6] sm:$0x1]
        %v797 = vlaneseq
        %v798 = vshrl.u32 %v797, 7
        %v799 = vsub.s32 0, %v798
        %v800 = vrot.slane %v795, %v799
        %802 = vmatprep.subr.mxu0 0.0
        %803 = vmatpush1.msra.mxu0 %v779
        %804 = vmatprep.subr.mxu0 0.0
        %805 = vmatpush1.msra.mxu0 %v780
        %806 = vmatprep.subr.mxu0 0.0
        %807 = vmatpush1.msra.mxu0 %v781
        %808 = vmatprep.subr.mxu0 0.0
        %809 = vmatpush1.msra.mxu0 %v782
        %810 = vmatprep.subr.mxu0 0.0
        %811 = vmatpush1.msra.mxu0 %v783
        %812 = vmatprep.subr.mxu0 0.0
        %813 = vmatpush1.msra.mxu0 %v784
        %814 = vmatprep.subr.mxu0 0.0
        %815 = vmatpush1.msra.mxu0 %v785
        %816 = vmatprep.subr.mxu0 0.0
        %817 = vmatpush1.msra.mxu0 %v786
        %818 = vmatprep.subr.mxu0 0.0
        %819 = vmatpush1.msra.mxu0 %v787
        %820 = vmatprep.subr.mxu0 0.0
        %821 = vmatpush1.msra.mxu0 %v788
        %822 = vmatprep.subr.mxu0 0.0
        %823 = vmatpush1.msra.mxu0 %v789
        %824 = vmatprep.subr.mxu0 0.0
        %825 = vmatpush1.msra.mxu0 %v790
        %826 = vmatprep.subr.mxu0 0.0
        %827 = vmatpush1.msra.mxu0 %v791
        %828 = vmatprep.subr.mxu0 0.0
        %829 = vmatpush1.msra.mxu0 %v792
        %830 = vmatprep.subr.mxu0 0.0
        %831 = vmatpush1.msra.mxu0 %v793
        %832 = vmatprep.subr.mxu0 0.0
        %833 = vmatpush1.msra.mxu0 %v794
        %834 = vmatprep.subr.mxu0 0.0
        %835 = vmatpush1.msra.mxu0 0.0
        %836 = vmatprep.subr.mxu0 0.0
        %837 = vmatpush1.msra.mxu0 0.0
        %838 = vmatprep.subr.mxu0 0.0
        %839 = vmatpush1.msra.mxu0 0.0
        %840 = vmatprep.subr.mxu0 0.0
        %841 = vmatpush1.msra.mxu0 0.0
        %842 = vmatprep.subr.mxu0 0.0
        %843 = vmatpush1.msra.mxu0 0.0
        %844 = vmatprep.subr.mxu0 0.0
        %845 = vmatpush1.msra.mxu0 0.0
        %846 = vmatprep.subr.mxu0 0.0
        %847 = vmatpush1.msra.mxu0 0.0
        %848 = vmatprep.subr.mxu0 0.0
        %849 = vmatpush1.msra.mxu0 0.0
        %850 = vmatprep.subr.mxu0 0.0
        %851 = vmatpush1.msra.mxu0 0.0
        %852 = vmatprep.subr.mxu0 0.0
        %853 = vmatpush1.msra.mxu0 0.0
        %854 = vmatprep.subr.mxu0 0.0
        %855 = vmatpush1.msra.mxu0 0.0
        %856 = vmatprep.subr.mxu0 0.0
        %857 = vmatpush1.msra.mxu0 0.0
        %858 = vmatprep.subr.mxu0 0.0
        %859 = vmatpush1.msra.mxu0 0.0
        %860 = vmatprep.subr.mxu0 0.0
        %861 = vmatpush1.msra.mxu0 0.0
        %862 = vmatprep.subr.mxu0 0.0
        %863 = vmatpush1.msra.mxu0 0.0
        %864 = vmatprep.subr.mxu0 0.0
        %865 = vmatpush1.msra.mxu0 0.0
        %866 = vmatprep.mubr.f32.mxu0 0.0
        %867 = vmatmul.mubr.f32.gmra.mrb[0].mxu0 %v759
        %v868 = vpop.f32.mrb[0].mxu0
        %v869 = vadd.f32 %v800, %v868
        %v870 = vpop.f32.mrb[0].mxu0
        %871 = vmatprep.mubr.f32.mxu0 0.0
        %872 = vmatmul.mubr.f32.gmra.mrb[0].mxu0 %v760
        %v873 = vpop.f32.mrb[0].mxu0
        %v874 = vadd.f32 %v800, %v873
        %v875 = vpop.f32.mrb[0].mxu0
        %876 = vmatprep.mubr.f32.mxu0 0.0
        %877 = vmatmul.mubr.f32.gmra.mrb[0].mxu0 %v761
        %v878 = vpop.f32.mrb[0].mxu0
        %v879 = vadd.f32 %v800, %v878
        %v880 = vpop.f32.mrb[0].mxu0
        %881 = vmatprep.mubr.f32.mxu0 0.0
        %882 = vmatmul.mubr.f32.gmra.mrb[0].mxu0 %v762
        %v883 = vpop.f32.mrb[0].mxu0
        %v884 = vadd.f32 %v800, %v883
        %v885 = vpop.f32.mrb[0].mxu0
        %886 = vmatprep.mubr.f32.mxu0 0.0
        %887 = vmatmul.mubr.f32.gmra.mrb[0].mxu0 %v763
        %v888 = vpop.f32.mrb[0].mxu0
        %v889 = vadd.f32 %v800, %v888
        %v890 = vpop.f32.mrb[0].mxu0
        %891 = vmatprep.mubr.f32.mxu0 0.0
        %892 = vmatmul.mubr.f32.gmra.mrb[0].mxu0 %v764
        %v893 = vpop.f32.mrb[0].mxu0
        %v894 = vadd.f32 %v800, %v893
        %v895 = vpop.f32.mrb[0].mxu0
        %896 = vmatprep.mubr.f32.mxu0 0.0
        %897 = vmatmul.mubr.f32.gmra.mrb[0].mxu0 %v765
        %v898 = vpop.f32.mrb[0].mxu0
        %v899 = vadd.f32 %v800, %v898
        %v900 = vpop.f32.mrb[0].mxu0
        %901 = vmatprep.mubr.f32.mxu0 0.0
        %902 = vmatmul.mubr.f32.gmra.mrb[0].mxu0 %v766
        %v903 = vpop.f32.mrb[0].mxu0
        %v904 = vadd.f32 %v800, %v903
        %v905 = vpop.f32.mrb[0].mxu0
        %906 = vmatprep.mubr.f32.mxu0 0.0
        %907 = vmatmul.mubr.f32.gmra.mrb[0].mxu0 %v767
        %v908 = vpop.f32.mrb[0].mxu0
        %v909 = vadd.f32 %v800, %v908
        %v910 = vpop.f32.mrb[0].mxu0
        %911 = vmatprep.mubr.f32.mxu0 0.0
        %912 = vmatmul.mubr.f32.gmra.mrb[0].mxu0 %v768
        %v913 = vpop.f32.mrb[0].mxu0
        %v914 = vadd.f32 %v800, %v913
        %v915 = vpop.f32.mrb[0].mxu0
        %916 = vmatprep.mubr.f32.mxu0 0.0
        %917 = vmatmul.mubr.f32.gmra.mrb[0].mxu0 %v769
        %v918 = vpop.f32.mrb[0].mxu0
        %v919 = vadd.f32 %v800, %v918
        %v920 = vpop.f32.mrb[0].mxu0
        %921 = vmatprep.mubr.f32.mxu0 0.0
        %922 = vmatmul.mubr.f32.gmra.mrb[0].mxu0 %v770
        %v923 = vpop.f32.mrb[0].mxu0
        %v924 = vadd.f32 %v800, %v923
        %v925 = vpop.f32.mrb[0].mxu0
        %926 = vmatprep.mubr.f32.mxu0 0.0
        %927 = vmatmul.mubr.f32.gmra.mrb[0].mxu0 %v771
        %v928 = vpop.f32.mrb[0].mxu0
        %v929 = vadd.f32 %v800, %v928
        %v930 = vpop.f32.mrb[0].mxu0
        %931 = vmatprep.mubr.f32.mxu0 0.0
        %932 = vmatmul.mubr.f32.gmra.mrb[0].mxu0 %v772
        %v933 = vpop.f32.mrb[0].mxu0
        %v934 = vadd.f32 %v800, %v933
        %v935 = vpop.f32.mrb[0].mxu0
        %936 = vmatprep.mubr.f32.mxu0 0.0
        %937 = vmatmul.mubr.f32.gmra.mrb[0].mxu0 %v773
        %v938 = vpop.f32.mrb[0].mxu0
        %v939 = vadd.f32 %v800, %v938
        %v940 = vpop.f32.mrb[0].mxu0
        %941 = vmatprep.mubr.f32.mxu0 0.0
        %942 = vmatmul.mubr.f32.gmra.mrb[0].mxu0 %v774
        %v943 = vpop.f32.mrb[0].mxu0
        %v944 = vadd.f32 %v800, %v943
        %v945 = vpop.f32.mrb[0].mxu0
        %946 = vmatprep.mubr.f32.mxu0 0.0
        %947 = vmatmul.mubr.f32.gmra.mrb[0].mxu0 %v775
        %v948 = vpop.f32.mrb[0].mxu0
        %v949 = vadd.f32 %v800, %v948
        %v950 = vpop.f32.mrb[0].mxu0
        %951 = vmatprep.mubr.f32.mxu0 0.0
        %952 = vmatmul.mubr.f32.gmra.mrb[0].mxu0 %v776
        %v953 = vpop.f32.mrb[0].mxu0
        %v954 = vadd.f32 %v800, %v953
        %v955 = vpop.f32.mrb[0].mxu0
        %956 = vmatprep.mubr.f32.mxu0 0.0
        %957 = vmatmul.mubr.f32.gmra.mrb[0].mxu0 %v777
        %v958 = vpop.f32.mrb[0].mxu0
        %v959 = vadd.f32 %v800, %v958
        %v960 = vpop.f32.mrb[0].mxu0
        %961 = vmatprep.mubr.f32.mxu0 0.0
        %962 = vmatmul.mubr.f32.gmra.mrb[0].mxu0 %v778
        %v963 = vpop.f32.mrb[0].mxu0
        %v964 = vadd.f32 %v800, %v963
        %v965 = vpop.f32.mrb[0].mxu0
        %966 = vdwg.mxu0
        %967 = vst [vmem:[%s340] sm:$0xff] %v869
        %968 = vst [vmem:[%s340 + $0x8] sm:$0xff] %v874
        %969 = vst [vmem:[%s340 + $0x10] sm:$0xff] %v879
        %970 = vst [vmem:[%s340 + $0x18] sm:$0xff] %v884
        %971 = vst [vmem:[%s340 + $0x20] sm:$0xff] %v889
        %972 = vst [vmem:[%s340 + $0x28] sm:$0xff] %v894
        %973 = vst [vmem:[%s340 + $0x30] sm:$0xff] %v899
        %974 = vst [vmem:[%s340 + $0x38] sm:$0xff] %v904
        %975 = vst [vmem:[%s340 + $0x40] sm:$0xff] %v909
        %976 = vst [vmem:[%s340 + $0x48] sm:$0xff] %v914
        %977 = vst [vmem:[%s340 + $0x50] sm:$0xff] %v919
        %978 = vst [vmem:[%s340 + $0x58] sm:$0xff] %v924
        %979 = vst [vmem:[%s340 + $0x60] sm:$0xff] %v929
        %980 = vst [vmem:[%s340 + $0x68] sm:$0xff] %v934
        %981 = vst [vmem:[%s340 + $0x70] sm:$0xff] %v939
        %982 = vst [vmem:[%s340 + $0x78] sm:$0xff] %v944
        %983 = vst [vmem:[%s340 + $0x80] sm:$0xff] %v949
        %984 = vst [vmem:[%s340 + $0x88] sm:$0xff] %v954
        %985 = vst [vmem:[%s340 + $0x90] sm:$0xff] %v959
        %986 = vst [vmem:[%s340 + $0x98] sm:$0xff] %v964
        %s987 = sand.u32 %s186, 1
        %s988 = scalar_lea.sflag [#allocation4], %s987
        %s989 = sand.u32 %s186, 1
        %s990 = smul.addr %s989, 160
        %s991 = scalar_lea.vmem [#allocation10], %s990
        // Predicated region
        $region65: #{tpu_custom_call.1} parent=47 // pred_check
          %p992 = pneg %p196
        $region66: #{tpu_custom_call.1} parent=47 // pred_check_branch
          %994 = sbr.rel (%p992) target = $region68
        $region67: #{tpu_custom_call.1} parent=47 // pred_region
          %s995 = smul.u32 20, %s26
          %s997 = ssub.s32 2560, 2560
          %998 = vsyncadd %s988, %s997
          %s999 = smul.addr %s995, 128
          %s1000 = scalar_lea.hbm %s7, %s999
          %s1001 = sshll.u32 %s991, 4
          %s1002 = int_to_ptr.vmem [resolvable:$true] %s1001
          %1007 = dma.vmem_to_hbm [thread:$0]  %s1002, 2560, %s1000, %s988, 128, 128, 8
        $region68: #{tpu_custom_call.1} parent=47 // pred_fallthru
          _
      $region48: #{tpu_custom_call.1} parent=5 // pred_fallthru
        _
      %p1008 = scmp.le.s32.totalorder 2, %s21
      // Predicated region
      $region69: #{tpu_custom_call.1} parent=5 // pred_check
        %p1009 = pneg %p1008
      $region70: #{tpu_custom_call.1} parent=5 // pred_check_branch
        %1011 = sbr.rel (%p1009) target = $region72
      $region71: #{tpu_custom_call.1} parent=5 // pred_region
        %s1012 = ssub.s32 %s21, 2
        // Predicated region
        $region73: #{tpu_custom_call.1} parent=71 // pred_check
          %p1013 = pneg %p202
        $region74: #{tpu_custom_call.1} parent=71 // pred_check_branch
          %1015 = sbr.rel (%p1013) target = $region76
        $region75: #{tpu_custom_call.1} parent=71 // pred_region
          %s1016 = sand.u32 %s187, 1
          %s1017 = scalar_lea.sflag [#allocation4], %s1016
          %s1018 = sand.u32 %s187, 1
          %s1019 = smul.addr %s1018, 160
          %s1020 = scalar_lea.vmem [#allocation10], %s1019
          %1021 = dma.done %s1017, 2560
        $region76: #{tpu_custom_call.1} parent=71 // pred_fallthru
          _
      $region72: #{tpu_custom_call.1} parent=5 // pred_fallthru
        _
    $region6: #{tpu_custom_call.1} parent=1 // loop_footer
      %s25 = sadd.s32 1, %s21
    $region7: #{tpu_custom_call.1} parent=1 // loop_footer_branch
      %20 = sbr.rel target = $region3
    $region8: #{tpu_custom_call.1} parent=1 // loop_exit
      _
    %1022 = vsyncpa [#allocation3], 1
    %s1023 = scalar_lea.sflag [#allocation3], 1
    %1024 = vsyncpa %s1023, 1
    %1025 = vsyncpa [#allocation6], 1
    %1026 = vsyncpa [#allocation9], 1
    %1027 = vsyncpa [#allocation4], 1
    %s1028 = scalar_lea.sflag [#allocation4], 1
    %1029 = vsyncpa %s1028, 1

</llo_original>
